<compile_context>
chip_gen: v7x
topology: tpu7x:2x2x1
jax: 0.10.0
libtpu: 0.0.40
codegen_flags: <defaults>
</compile_context>

<pallas_src>
import functools

import jax
import jax.numpy as jnp
from jax.experimental import pallas as pl
from jax.experimental.pallas import tpu as pltpu


def _round_up(x, m):
    return ((x + m - 1) // m) * m


def _linear_attention_kernel(feat_ref, mask_ref, bias_ref, w_ref, b_ref, v_ref,
                             out_ref, *, approx_recip):
    # feat_ref : [TB, L, D]  raw feature tile (caller dtype: f32 or bf16)
    # mask_ref : [TB, L]     dmask tile, f32
    # bias_ref : [TB, L]     (c + q_logit) * mask + (1 - mask) * (-1e30), f32
    # w_ref    : [D, D]      self.linear weight, transposed [in, out], matmul dtype
    # b_ref    : [1, D]      self.linear bias, f32
    # v_ref    : [1, D]      W @ fc_w[:D]  (fc feature-half folded through W), f32
    # out_ref  : [TB, D]     f32

    # fc logit of the feature half, computed on the RAW feature:
    #   (feat @ W + b) . fcw1 == feat . (W @ fcw1) + b . fcw1
    # VPU multiply + lane (last-axis) reduce; no MXU, no [TB*L, D] intermediate.
    raw = jnp.sum(feat_ref[...] * v_ref[...], axis=-1)            # [TB, L], f32

    # Exact mask_logits semantics: logit * mask + (1 - mask) * (-1e30).
    # bias already carries (c + q_logit) * mask + (1 - mask) * (-1e30).
    masked = raw * mask_ref[...] + bias_ref[...]                   # [TB, L]

    # Softmax over L (lane axis), all in f32.
    m = jnp.max(masked, axis=-1, keepdims=True)
    e = jnp.exp(masked - m)
    denom = jnp.sum(e, axis=-1, keepdims=True)
    if approx_recip:
        attn = e * pl.reciprocal(denom, approx=True)               # EUP slot
    else:
        attn = e / denom                                           # exact (f32 path)

    # Weighted pool of the RAW feature over L: VPU multiply + sublane reduce.
    ctx = jnp.sum(attn[:, :, None] * feat_ref[...], axis=1)        # [TB, D], f32

    # Apply the linear layer once to the pooled vector (softmax weights sum to 1):
    #   sum_l attn_l * (feat_l @ W + b) == (sum_l attn_l * feat_l) @ W + b
    out = jnp.dot(ctx.astype(w_ref.dtype), w_ref[...],
                  preferred_element_type=jnp.float32) + b_ref[...]
    out_ref[...] = out.astype(out_ref.dtype)


def linear_attention(feature, aspect_v, dmask, w_t, b, fc_w, fc_b, *,
                     block_batch=None, matmul_dtype=jnp.bfloat16):
    """feature [N,L,D], aspect_v [N,D], dmask [N,L] -> [N,D] (f32).

    w_t  : [D, D]   self.linear weight, transposed ([in, out])
    b    : [D]      self.linear bias
    fc_w : [2D, 1]  self.fc weight, transposed ([in, out])
    fc_b : [1]      self.fc bias
    matmul_dtype : dtype of the (tb, D) @ (D, D) MXU operands (pooled ctx and W).
                   Softmax / accumulation always stay f32; pass jnp.float32 for
                   full-fidelity output.
    The feature tensor is consumed in the caller's dtype with NO wrapper-side
    pad / cast copy; pass a bf16 feature to halve HBM traffic of the dominant
    stream.
    """
    f32 = jnp.float32
    N, L, D = feature.shape
    cdt = jnp.dtype(f32 if matmul_dtype is None else matmul_dtype)
    hi = jax.lax.Precision.HIGHEST                    # tiny folds: keep them exact

    w_t = w_t.astype(f32)
    b = b.astype(f32).reshape(1, D)
    fc_w = fc_w.astype(f32)
    fc_b = fc_b.astype(f32)
    fcw1 = fc_w[:D, :]                                # feature half of fc weight [D,1]
    fcw2 = fc_w[D:, :]                                # Q half of fc weight       [D,1]

    # ---- fold the fc feature-half through the linear layer ----
    v = jnp.matmul(w_t, fcw1, precision=hi).reshape(1, D)        # W @ fcw1
    c = jnp.matmul(b, fcw1, precision=hi)                        # b . fcw1   [1,1]

    # ---- Q path collapsed to a single mat-vec ----
    #   q_logit = ((aspect_v @ W + b) @ W + b) @ fcw2 + fc_b
    #           = aspect_v @ (W @ (W @ fcw2)) + b @ (W @ fcw2) + b @ fcw2 + fc_b
    w_fcw2 = jnp.matmul(w_t, fcw2, precision=hi)                 # [D, 1]
    u = jnp.matmul(w_t, w_fcw2, precision=hi)                    # [D, 1]
    q_const = (jnp.matmul(b, w_fcw2, precision=hi)
               + jnp.matmul(b, fcw2, precision=hi) + fc_b)       # [1, 1]
    q_logit = jnp.matmul(aspect_v.astype(f32), u, precision=hi) + q_const   # [N, 1]

    # ---- fold q_logit + mask into one additive bias (exact mask_logits) ----
    mask = dmask.astype(f32)                                     # [N, L]
    bias = (c + q_logit) * mask + (1.0 - mask) * (-1e30)         # [N, L]

    # ---- batch-tile size from the queried VMEM capacity ----
    try:
        cap = int(getattr(pltpu.get_tpu_info(), "vmem_capacity_bytes", 64 << 20))
    except Exception:
        cap = 64 << 20                                           # conservative fallback
    feat_elt = jnp.dtype(feature.dtype).itemsize
    row_bytes = max(L * D * feat_elt, 1)
    if block_batch is None:
        tile_budget = min(2 << 20, max(cap // 16, 1 << 20))      # ~1-2 MiB feature tile
        tb = max(8, tile_budget // row_bytes)
    else:
        tb = max(1, int(block_batch))
    if N <= 8:
        tb = N                                  # whole batch in one full-dim block
    else:
        tb = max(8, (min(tb, N) // 8) * 8)      # sublane-aligned; ragged tail is OK
        if tb >= N and N >= 16:
            # keep >= 2 grid steps so megacore / both v7x TensorCores get work
            tb = max(8, _round_up((N + 1) // 2, 8))
    grid = (pl.cdiv(N, tb),)

    w_k = w_t.astype(cdt)                                        # [D, D], small

    # VMEM budget: double-buffered feature/out/mask/bias tiles + weights.
    est = (2 * tb * L * D * feat_elt
           + 2 * tb * D * 4
           + 4 * tb * L * 4
           + 2 * (D * D * cdt.itemsize + 2 * D * 4))
    vmem_limit = int(min(max(2 * est, 32 << 20), max(cap - (8 << 20), 32 << 20)))

    kernel = functools.partial(_linear_attention_kernel,
                               approx_recip=(cdt != jnp.dtype(jnp.float32)))

    out = pl.pallas_call(
        kernel,
        out_shape=jax.ShapeDtypeStruct((N, D), f32),
        grid_spec=pltpu.PrefetchScalarGridSpec(
            num_scalar_prefetch=0,
            grid=grid,
            in_specs=[
                # Feature tile: last two block dims are the FULL L / D, so no
                # (8,128) padding or wrapper-side copy is needed.
                pl.BlockSpec((tb, L, D), lambda i: (i, 0, 0)),
                pl.BlockSpec((tb, L), lambda i: (i, 0)),         # mask tile
                pl.BlockSpec((tb, L), lambda i: (i, 0)),         # additive bias tile
                # Grid-invariant weights (constant index_map -> fetched once).
                # TODO(synk): for very large D, single-buffer W (pl.Buffered(1))
                # or stage it once from a pl.ANY ref to free v7x VMEM headroom.
                pl.BlockSpec((D, D), lambda i: (0, 0)),          # linear W^T
                pl.BlockSpec((1, D), lambda i: (0, 0)),          # linear bias
                pl.BlockSpec((1, D), lambda i: (0, 0)),          # W @ fc_w[:D]
            ],
            out_specs=pl.BlockSpec((tb, D), lambda i: (i, 0)),
        ),
        compiler_params=pltpu.CompilerParams(
            dimension_semantics=("parallel",),
            vmem_limit_bytes=vmem_limit),
    )(feature, mask, bias, w_k, b, v)

    return out


def _reference(feature, aspect_v, dmask, w_t, b, fc_w, fc_b):
    """Pure-JAX replica of the PyTorch forward for verification."""
    lin = lambda x: x @ w_t + b
    q = lin(lin(aspect_v))[:, None, :]                       # [N, 1, D]
    q = jnp.broadcast_to(q, feature.shape)                   # [N, L, D]
    f = lin(feature)                                         # [N, L, D]
    att = jnp.concatenate([f, q], axis=2) @ fc_w + fc_b      # [N, L, 1]
    m = dmask[:, :, None]
    att = att * m + (1 - m) * (-1e30)                        # mask_logits
    attn = jax.nn.softmax(att, axis=1)                       # [N, L, 1]
    out = jnp.einsum("nld,nlo->ndo", f, attn)[:, :, 0]       # [N, D]
    return out


if __name__ == "__main__":
    key = jax.random.PRNGKey(0)
    k1, k2, k3, k4, k5, k6, k7, k8, k9, k10 = jax.random.split(key, 10)

    D, L = 32, 8            # in_dim == mem_dim == D (required by expand_as)
    scale = 1.0 / jnp.sqrt(D)
    w_t = jax.random.uniform(k4, (D, D), minval=-scale, maxval=scale,
                             dtype=jnp.float32)              # linear weight, [in, out]
    b = jax.random.uniform(k5, (D,), minval=-scale, maxval=scale,
                           dtype=jnp.float32)                # linear bias
    scale_fc = 1.0 / jnp.sqrt(2 * D)
    fc_w = jax.random.uniform(k6, (2 * D, 1), minval=-scale_fc, maxval=scale_fc,
                              dtype=jnp.float32)             # fc weight, [in, out]
    fc_b = jax.random.uniform(k7, (1,), minval=-scale_fc, maxval=scale_fc,
                              dtype=jnp.float32)             # fc bias

    # --- case 1: tiny batch (whole batch in one block) ---
    N = 2
    feature = jax.random.normal(k1, (N, L, D), dtype=jnp.float32)
    aspect_v = jax.random.normal(k2, (N, D), dtype=jnp.float32)
    dmask = (jax.random.uniform(k3, (N, L)) > 0.3).astype(jnp.float32)
    ref = _reference(feature, aspect_v, dmask, w_t, b, fc_w, fc_b)

    out_f32 = jax.block_until_ready(
        linear_attention(feature, aspect_v, dmask, w_t, b, fc_w, fc_b,
                         matmul_dtype=jnp.float32))
    assert out_f32.shape == (N, D)
    assert jnp.allclose(out_f32, ref, atol=1e-3, rtol=1e-3), "f32 mismatch vs reference"

    out_def = jax.block_until_ready(
        linear_attention(feature, aspect_v, dmask, w_t, b, fc_w, fc_b))
    assert jnp.allclose(out_def, ref, atol=3e-2, rtol=3e-2), "bf16 mismatch vs reference"

    # --- case 2: ragged batch tail (N not a multiple of the batch tile) ---
    N2 = 13
    feature2 = jax.random.normal(k8, (N2, L, D), dtype=jnp.float32)
    aspect_v2 = jax.random.normal(k9, (N2, D), dtype=jnp.float32)
    dmask2 = (jax.random.uniform(k10, (N2, L)) > 0.3).astype(jnp.float32)
    ref2 = _reference(feature2, aspect_v2, dmask2, w_t, b, fc_w, fc_b)
    out2 = jax.block_until_ready(
        linear_attention(feature2, aspect_v2, dmask2, w_t, b, fc_w, fc_b,
                         matmul_dtype=jnp.float32, block_batch=8))
    assert out2.shape == (N2, D)
    assert jnp.allclose(out2, ref2, atol=1e-3, rtol=1e-3), "ragged-tile mismatch vs reference"

    print("KERNEL_OK")
</pallas_src>

<mosaic_0001>
module attributes {stable_mosaic.version = 11 : i64} {
  func.func @_linear_attention_kernel(%arg0: i32, %arg1: memref<2x8x32xf32, #tpu.memory_space<vmem>>, %arg2: memref<2x8xf32, #tpu.memory_space<vmem>>, %arg3: memref<2x8xf32, #tpu.memory_space<vmem>>, %arg4: memref<32x32xf32, #tpu.memory_space<vmem>>, %arg5: memref<1x32xf32, #tpu.memory_space<vmem>>, %arg6: memref<1x32xf32, #tpu.memory_space<vmem>>, %arg7: memref<2x32xf32, #tpu.memory_space<vmem>>) attributes {dimension_semantics = [#tpu.dimension_semantics<parallel>], iteration_bounds = array<i64: 1>, scalar_prefetch = 0 : i64, scratch_operands = 0 : i64, tpu.core_type = #tpu.core_type<tc>, window_params = [{transform_indices = @transform_0, window_bounds = array<i64: 2, 8, 32>}, {transform_indices = @transform_1, window_bounds = array<i64: 2, 8>}, {transform_indices = @transform_2, window_bounds = array<i64: 2, 8>}, {pipeline_mode = #tpu.pipeline_mode<synchronous>, transform_indices = @transform_3, window_bounds = array<i64: 32, 32>}, {pipeline_mode = #tpu.pipeline_mode<synchronous>, transform_indices = @transform_4, window_bounds = array<i64: 1, 32>}, {pipeline_mode = #tpu.pipeline_mode<synchronous>, transform_indices = @transform_5, window_bounds = array<i64: 1, 32>}, {transform_indices = @transform_6, window_bounds = array<i64: 2, 32>}]} {
    %c0 = arith.constant 0 : index
    %c0_0 = arith.constant 0 : index
    %c0_1 = arith.constant 0 : index
    %0 = vector.load %arg1[%c0, %c0_0, %c0_1] : memref<2x8x32xf32, #tpu.memory_space<vmem>>, vector<2x8x32xf32>
    %c0_2 = arith.constant 0 : index
    %c0_3 = arith.constant 0 : index
    %1 = vector.load %arg6[%c0_2, %c0_3] : memref<1x32xf32, #tpu.memory_space<vmem>>, vector<1x32xf32>
    %2 = vector.shape_cast %1 : vector<1x32xf32> to vector<1x1x32xf32>
    %3 = vector.broadcast %2 : vector<1x1x32xf32> to vector<2x8x32xf32>
    %4 = arith.mulf %0, %3 : vector<2x8x32xf32>
    %cst = arith.constant dense<0.000000e+00> : vector<2x8xf32>
    %5 = vector.multi_reduction <add>, %4, %cst [2] : vector<2x8x32xf32> to vector<2x8xf32>
    %c0_4 = arith.constant 0 : index
    %c0_5 = arith.constant 0 : index
    %6 = vector.load %arg2[%c0_4, %c0_5] : memref<2x8xf32, #tpu.memory_space<vmem>>, vector<2x8xf32>
    %7 = arith.mulf %5, %6 : vector<2x8xf32>
    %c0_6 = arith.constant 0 : index
    %c0_7 = arith.constant 0 : index
    %8 = vector.load %arg3[%c0_6, %c0_7] : memref<2x8xf32, #tpu.memory_space<vmem>>, vector<2x8xf32>
    %9 = arith.addf %7, %8 : vector<2x8xf32>
    %cst_8 = arith.constant dense<0xFF800000> : vector<2xf32>
    %10 = vector.multi_reduction <maximumf>, %9, %cst_8 [1] : vector<2x8xf32> to vector<2xf32>
    %11 = vector.shape_cast %10 : vector<2xf32> to vector<2x1xf32>
    %12 = vector.broadcast %11 : vector<2x1xf32> to vector<2x8xf32>
    %13 = arith.subf %9, %12 : vector<2x8xf32>
    %14 = math.exp %13 : vector<2x8xf32>
    %cst_9 = arith.constant dense<0.000000e+00> : vector<2xf32>
    %15 = vector.multi_reduction <add>, %14, %cst_9 [1] : vector<2x8xf32> to vector<2xf32>
    %16 = vector.shape_cast %15 : vector<2xf32> to vector<2x1xf32>
    %17 = vector.broadcast %16 : vector<2x1xf32> to vector<2x8xf32>
    %18 = arith.divf %14, %17 : vector<2x8xf32>
    %19 = vector.shape_cast %18 : vector<2x8xf32> to vector<2x8x1xf32>
    %c0_10 = arith.constant 0 : index
    %c0_11 = arith.constant 0 : index
    %c0_12 = arith.constant 0 : index
    %20 = vector.load %arg1[%c0_10, %c0_11, %c0_12] : memref<2x8x32xf32, #tpu.memory_space<vmem>>, vector<2x8x32xf32>
    %21 = vector.broadcast %19 : vector<2x8x1xf32> to vector<2x8x32xf32>
    %22 = arith.mulf %21, %20 : vector<2x8x32xf32>
    %cst_13 = arith.constant dense<0.000000e+00> : vector<2x32xf32>
    %23 = vector.multi_reduction <add>, %22, %cst_13 [1] : vector<2x8x32xf32> to vector<2x32xf32>
    %c0_14 = arith.constant 0 : index
    %c0_15 = arith.constant 0 : index
    %24 = vector.load %arg4[%c0_14, %c0_15] : memref<32x32xf32, #tpu.memory_space<vmem>>, vector<32x32xf32>
    %cst_16 = arith.constant dense<0.000000e+00> : vector<2x32xf32>
    %25 = tpu.matmul %23, %24, %cst_16 {dimension_numbers = #tpu.dot_dimension_numbers<[1], [0], [0], [1], [0, 0, 1, 1], [], []>} : vector<2x32xf32>, vector<32x32xf32>, vector<2x32xf32> -> vector<2x32xf32>
    %c0_17 = arith.constant 0 : index
    %c0_18 = arith.constant 0 : index
    %26 = vector.load %arg5[%c0_17, %c0_18] : memref<1x32xf32, #tpu.memory_space<vmem>>, vector<1x32xf32>
    %27 = vector.broadcast %26 : vector<1x32xf32> to vector<2x32xf32>
    %28 = arith.addf %25, %27 : vector<2x32xf32>
    %c0_19 = arith.constant 0 : index
    %c0_20 = arith.constant 0 : index
    %29 = vector.load %arg7[%c0_19, %c0_20] : memref<2x32xf32, #tpu.memory_space<vmem>>, vector<2x32xf32>
    tpu.vector_store %arg7[%c0_19, %c0_20], %28 {strides = array<i32>} : memref<2x32xf32, #tpu.memory_space<vmem>>, vector<2x32xf32>,
    return
  }
  func.func @transform_0(%arg0: i32) -> (i32, i32, i32) {
    %c0_i32 = arith.constant 0 : i32
    %c0_i32_0 = arith.constant 0 : i32
    %c0_i32_1 = arith.constant 0 : i32
    return %arg0, %c0_i32, %c0_i32_0 : i32, i32, i32
  }
  func.func @transform_1(%arg0: i32) -> (i32, i32) {
    %c0_i32 = arith.constant 0 : i32
    %c0_i32_0 = arith.constant 0 : i32
    return %arg0, %c0_i32 : i32, i32
  }
  func.func @transform_2(%arg0: i32) -> (i32, i32) {
    %c0_i32 = arith.constant 0 : i32
    %c0_i32_0 = arith.constant 0 : i32
    return %arg0, %c0_i32 : i32, i32
  }
  func.func @transform_3(%arg0: i32) -> (i32, i32) {
    %c0_i32 = arith.constant 0 : i32
    %c0_i32_0 = arith.constant 0 : i32
    %c0_i32_1 = arith.constant 0 : i32
    return %c0_i32, %c0_i32_0 : i32, i32
  }
  func.func @transform_4(%arg0: i32) -> (i32, i32) {
    %c0_i32 = arith.constant 0 : i32
    %c0_i32_0 = arith.constant 0 : i32
    %c0_i32_1 = arith.constant 0 : i32
    return %c0_i32, %c0_i32_0 : i32, i32
  }
  func.func @transform_5(%arg0: i32) -> (i32, i32) {
    %c0_i32 = arith.constant 0 : i32
    %c0_i32_0 = arith.constant 0 : i32
    %c0_i32_1 = arith.constant 0 : i32
    return %c0_i32, %c0_i32_0 : i32, i32
  }
  func.func @transform_6(%arg0: i32) -> (i32, i32) {
    %c0_i32 = arith.constant 0 : i32
    %c0_i32_0 = arith.constant 0 : i32
    return %arg0, %c0_i32 : i32, i32
  }
}

</mosaic_0001>

<llo_original>
// kernel: tpu_custom_call.1
$region0: #{tpu_custom_call.1}
  #allocation0 [shape = 'u32[]', space=smem, size = 0x4, offset = 0x4, fixed_abs, tag = 'smem constant byte address 0x4 - core index']
  #allocation1 [shape = 'u32[144,128]{1,0:T(1,128)}', space=vmem, size = 0x12000, scoped, tag = 'internal scratch']
  %s0 = inlined_call_operand.hbm [shape: f32[2,8,32], index: 0, kind: input, shape index: {}]
  %s1 = inlined_call_operand.vmem [shape: f32[2,8], index: 1, kind: input, shape index: {}]
  %s2 = inlined_call_operand.vmem [shape: f32[2,8], index: 2, kind: input, shape index: {}]
  %s3 = inlined_call_operand.hbm [shape: f32[32,32], index: 3, kind: input, shape index: {}]
  %s4 = inlined_call_operand.vmem [shape: f32[1,32], index: 4, kind: input, shape index: {}]
  %s5 = inlined_call_operand.vmem [shape: f32[1,32], index: 5, kind: input, shape index: {}]
  %s6 = inlined_call_operand.hbm [shape: f32[2,32], index: 6, kind: output, shape index: {}]
  %s7 = sld [smem:[#allocation0]]
  $region42: #{tpu_custom_call.1} parent=0
    _
  %s9 = ssub.s32 1, %s7
  %s10 = scalar_select 0, %s9, %s7
  $region1: #{tpu_custom_call.1} parent=0
    #allocation2 [shape = 'u8[8192]{0}', space=vmem, size = 0x2000, scoped, tag = 'input window, operand 0, single buffered']
    #allocation3 [shape = 's32[1]{0}', space=sflag, size = 0x4, scoped, tag = 'scoped memory for tpu_custom_call.1']
    #allocation4 [shape = 's32[1]{0}', space=sflag, size = 0x4, scoped, tag = 'scoped memory for tpu_custom_call.1']
    #allocation5 [shape = 'u8[16384]{0}', space=vmem, size = 0x4000, scoped, tag = 'input window, operand 3, single buffered']
    #allocation6 [shape = 's32[1]{0}', space=sflag, size = 0x4, scoped, tag = 'scoped memory for tpu_custom_call.1']
    #allocation7 [shape = 'u8[1024]{0}', space=vmem, size = 0x400, scoped, tag = 'output window, operand 0, single buffered']
    %11 = vsyncpa [#allocation3], 0
    %12 = vsyncpa [#allocation6], 0
    %13 = vsyncpa [#allocation4], 0
    // Predicated region
    $region2: #{tpu_custom_call.1} parent=1 // pred_check
      _
    $region3: #{tpu_custom_call.1} parent=1 // pred_check_branch
      %15 = sbr.rel (0) target = $region5
    $region4: #{tpu_custom_call.1} parent=1 // pred_region
      %s17 = ssub.s32 256, 256
      %18 = vsyncadd [#allocation3], %s17
      %s19 = sshll.u32 [#allocation2], 4
      %s20 = int_to_ptr.vmem [resolvable:$true] %s19
      %25 = dma.hbm_to_vmem [thread:$0]  %s0, 256, %s20, [#allocation3], 128, 128, 8
    $region5: #{tpu_custom_call.1} parent=1 // pred_fallthru
      _
    // Predicated region
    $region6: #{tpu_custom_call.1} parent=1 // pred_check
      _
    $region7: #{tpu_custom_call.1} parent=1 // pred_check_branch
      %27 = sbr.rel (0) target = $region9
    $region8: #{tpu_custom_call.1} parent=1 // pred_region
      _
    $region9: #{tpu_custom_call.1} parent=1 // pred_fallthru
      _
    // Predicated region
    $region10: #{tpu_custom_call.1} parent=1 // pred_check
      _
    $region11: #{tpu_custom_call.1} parent=1 // pred_check_branch
      %29 = sbr.rel (0) target = $region13
    $region12: #{tpu_custom_call.1} parent=1 // pred_region
      _
    $region13: #{tpu_custom_call.1} parent=1 // pred_fallthru
      _
    // Predicated region
    $region14: #{tpu_custom_call.1} parent=1 // pred_check
      _
    $region15: #{tpu_custom_call.1} parent=1 // pred_check_branch
      %31 = sbr.rel (0) target = $region17
    $region16: #{tpu_custom_call.1} parent=1 // pred_region
      %s33 = ssub.s32 512, 512
      %34 = vsyncadd [#allocation6], %s33
      %s35 = sshll.u32 [#allocation5], 4
      %s36 = int_to_ptr.vmem [resolvable:$true] %s35
      %41 = dma.hbm_to_vmem [thread:$0]  %s3, 512, %s36, [#allocation6], 128, 128, 8
    $region17: #{tpu_custom_call.1} parent=1 // pred_fallthru
      _
    // Predicated region
    $region18: #{tpu_custom_call.1} parent=1 // pred_check
      _
    $region19: #{tpu_custom_call.1} parent=1 // pred_check_branch
      %43 = sbr.rel (0) target = $region21
    $region20: #{tpu_custom_call.1} parent=1 // pred_region
      _
    $region21: #{tpu_custom_call.1} parent=1 // pred_fallthru
      _
    // Predicated region
    $region22: #{tpu_custom_call.1} parent=1 // pred_check
      _
    $region23: #{tpu_custom_call.1} parent=1 // pred_check_branch
      %45 = sbr.rel (0) target = $region25
    $region24: #{tpu_custom_call.1} parent=1 // pred_region
      _
    $region25: #{tpu_custom_call.1} parent=1 // pred_fallthru
      _
    // Predicated region
    $region26: #{tpu_custom_call.1} parent=1 // pred_check
      _
    $region27: #{tpu_custom_call.1} parent=1 // pred_check_branch
      %47 = sbr.rel (0) target = $region29
    $region28: #{tpu_custom_call.1} parent=1 // pred_region
      %48 = dma.done [#allocation3], 256
    $region29: #{tpu_custom_call.1} parent=1 // pred_fallthru
      _
    // Predicated region
    $region30: #{tpu_custom_call.1} parent=1 // pred_check
      _
    $region31: #{tpu_custom_call.1} parent=1 // pred_check_branch
      %50 = sbr.rel (0) target = $region33
    $region32: #{tpu_custom_call.1} parent=1 // pred_region
      %51 = dma.done [#allocation6], 512
    $region33: #{tpu_custom_call.1} parent=1 // pred_fallthru
      _
    %v52 = vld [vmem:[#allocation2] sm:$0xff]
    %v53 = vld [vmem:[#allocation2 + $0x8] sm:$0xff]
    %v54 = vld [vmem:[%s5] sm:$0x1]
    %v56 = vlaneseq
    %v57 = vshrl.u32 %v56, 7
    %v58 = vsub.s32 0, %v57
    %v59 = vrot.slane %v54, %v58
    %v61 = vmul.f32 %v52, %v59
    %v62 = vmul.f32 %v53, %v59
    %vm63 = vcmask 261120
    %v64 = vsel %vm63, %v61, 0.0
    %65 = vadd.xlane.f32.xlu0 %v64
    %v66 = vpop.xlane.xlu0 %65
    %v67 = vsel %vm63, %v62, 0.0
    %68 = vadd.xlane.f32.xlu0 %v67
    %v69 = vpop.xlane.xlu0 %68
    %v70 = vld [vmem:[%s1] sm:$0x3]
    %v72 = vlaneseq
    %v73 = vshrl.u32 %v72, 7
    %v74 = vsub.s32 0, %v73
    %v75 = vrot.slane %v70, %v74
    %77 = vbcast.lane.b32.xlu0 %v75, 256
    %v78 = vpop.permute.xlu0 %77
    %v79 = vlaneseq
    %v80 = vshrl.u32 %v79, 7
    %v81 = vsub.s32 1, %v80
    %v82 = vrot.slane %v70, %v81
    %84 = vbcast.lane.b32.xlu0 %v82, 256
    %v85 = vpop.permute.xlu0 %84
    %v88 = vmul.f32 %v66, %v78
    %v89 = vmul.f32 %v69, %v85
    %v90 = vld [vmem:[%s2] sm:$0x3]
    %v92 = vlaneseq
    %v93 = vshrl.u32 %v92, 7
    %v94 = vsub.s32 0, %v93
    %v95 = vrot.slane %v90, %v94
    %97 = vbcast.lane.b32.xlu0 %v95, 256
    %v98 = vpop.permute.xlu0 %97
    %v99 = vlaneseq
    %v100 = vshrl.u32 %v99, 7
    %v101 = vsub.s32 1, %v100
    %v102 = vrot.slane %v90, %v101
    %104 = vbcast.lane.b32.xlu0 %v102, 256
    %v105 = vpop.permute.xlu0 %104
    %v108 = vadd.f32 %v88, %v98
    %v109 = vadd.f32 %v89, %v105
    %112 = vset.pattern.permute.xlu0 0
    %113 = vperm.xlu0 %112, %v108
    %v114 = vpop.permute.xlu0 %113
    %115 = vset.pattern.permute.xlu0 0
    %116 = vperm.xlu0 %115, %v109
    %v117 = vpop.permute.xlu0 %116
    %v118 = vlaneseq
    %v119 = vand.u32 %v118, 127
    %v120 = vlaneseq
    %v121 = vshrl.u32 %v120, 7
    %v122 = vsub.s32 %v119, %v121
    %v123 = vrot.slane %v114, %v122
    %v124 = vlaneseq
    %v125 = vshrl.u32 %v124, 7
    %v126 = vsub.s32 %v119, %v125
    %v127 = vrot.slane %v117, %v126
    %vm128 = vcmask 1041409
    %v129 = vsel %vm128, %v127, %v123
    %vm131 = vcmask 58368
    %v132 = vsel %vm131, %v129, -inf
    %133 = vmax.xlane.f32.xlu0 %v132
    %v134 = vpop.xlane.xlu0 %133
    %v136 = vlaneseq
    %v137 = vshrl.u32 %v136, 7
    %v138 = vsub.s32 0, %v137
    %v139 = vrot.slane %v134, %v138
    %v140 = vlaneseq
    %v141 = vshrl.u32 %v140, 7
    %v142 = vsub.s32 1, %v141
    %v143 = vrot.slane %v134, %v142
    %v146 = vsub.f32 %v108, %v139
    %v147 = vsub.f32 %v109, %v143
    %v148 = vmul.f32 %v146, 1.442695
    %v149 = vpow.pop %v148
    %v150 = vmul.f32 %v147, 1.442695
    %v151 = vpow.pop %v150
    %154 = vset.pattern.permute.xlu0 0
    %155 = vperm.xlu0 %154, %v149
    %v156 = vpop.permute.xlu0 %155
    %157 = vset.pattern.permute.xlu0 0
    %158 = vperm.xlu0 %157, %v151
    %v159 = vpop.permute.xlu0 %158
    %v160 = vlaneseq
    %v161 = vshrl.u32 %v160, 7
    %v162 = vsub.s32 %v119, %v161
    %v163 = vrot.slane %v156, %v162
    %v164 = vlaneseq
    %v165 = vshrl.u32 %v164, 7
    %v166 = vsub.s32 %v119, %v165
    %v167 = vrot.slane %v159, %v166
    %v168 = vsel %vm128, %v167, %v163
    %v170 = vsel %vm131, %v168, 0.0
    %171 = vadd.xlane.f32.xlu0 %v170
    %v172 = vpop.xlane.xlu0 %171
    %v174 = vlaneseq
    %v175 = vshrl.u32 %v174, 7
    %v176 = vsub.s32 0, %v175
    %v177 = vrot.slane %v172, %v176
    %v178 = vlaneseq
    %v179 = vshrl.u32 %v178, 7
    %v180 = vsub.s32 1, %v179
    %v181 = vrot.slane %v172, %v180
    %v184 = vrcp.pop %v177
    %v185 = vmul.f32 %v149, %v184
    %v186 = vrcp.pop %v181
    %v187 = vmul.f32 %v151, %v186
    %189 = vset.pattern.permute.xlu0 0
    %190 = vperm.xlu0 %189, %v185
    %v191 = vpop.permute.xlu0 %190
    %194 = vset.pattern.permute.xlu0 0
    %195 = vperm.xlu0 %194, %v187
    %v196 = vpop.permute.xlu0 %195
    %v198 = vmul.f32 %v191, %v52
    %v199 = vmul.f32 %v196, %v53
    %v200 = vsel %vm63, %v198, 0.0
    %v201 = vrot.slane %v200, 4
    %v202 = vadd.f32 %v200, %v201
    %v203 = vrot.slane %v202, 2
    %v204 = vadd.f32 %v202, %v203
    %v205 = vrot.slane %v204, 1
    %v206 = vadd.f32 %v204, %v205
    %v207 = vsel %vm63, %v199, 0.0
    %v208 = vrot.slane %v207, 4
    %v209 = vadd.f32 %v207, %v208
    %v210 = vrot.slane %v209, 2
    %v211 = vadd.f32 %v209, %v210
    %v212 = vrot.slane %v211, 1
    %v213 = vadd.f32 %v211, %v212
    %v214 = vld [vmem:[#allocation5] sm:$0xff]
    %v215 = vld [vmem:[#allocation5 + $0x8] sm:$0xff]
    %v216 = vld [vmem:[#allocation5 + $0x10] sm:$0xff]
    %v217 = vld [vmem:[#allocation5 + $0x18] sm:$0xff]
    %v218 = vld [vmem:[%s4] sm:$0x1]
    %v220 = vlaneseq
    %v221 = vshrl.u32 %v220, 7
    %v222 = vsub.s32 0, %v221
    %v223 = vrot.slane %v218, %v222
    %v227 = vsel %vm128, %v213, %v206
    %v228 = vsel %vm63, %v227, 0
    %230 = vmatprep.subr.mxu0 0.0
    %231 = vmatpush1.msra.mxu0 %v214
    %232 = vmatprep.subr.mxu0 0.0
    %233 = vmatpush1.msra.mxu0 %v215
    %234 = vmatprep.subr.mxu0 0.0
    %235 = vmatpush1.msra.mxu0 %v216
    %236 = vmatprep.subr.mxu0 0.0
    %237 = vmatpush1.msra.mxu0 %v217
    %238 = vmatprep.subr.mxu0 0.0
    %239 = vmatpush1.msra.mxu0 0.0
    %240 = vmatprep.subr.mxu0 0.0
    %241 = vmatpush1.msra.mxu0 0.0
    %242 = vmatprep.subr.mxu0 0.0
    %243 = vmatpush1.msra.mxu0 0.0
    %244 = vmatprep.subr.mxu0 0.0
    %245 = vmatpush1.msra.mxu0 0.0
    %246 = vmatprep.subr.mxu0 0.0
    %247 = vmatpush1.msra.mxu0 0.0
    %248 = vmatprep.subr.mxu0 0.0
    %249 = vmatpush1.msra.mxu0 0.0
    %250 = vmatprep.subr.mxu0 0.0
    %251 = vmatpush1.msra.mxu0 0.0
    %252 = vmatprep.subr.mxu0 0.0
    %253 = vmatpush1.msra.mxu0 0.0
    %254 = vmatprep.subr.mxu0 0.0
    %255 = vmatpush1.msra.mxu0 0.0
    %256 = vmatprep.subr.mxu0 0.0
    %257 = vmatpush1.msra.mxu0 0.0
    %258 = vmatprep.subr.mxu0 0.0
    %259 = vmatpush1.msra.mxu0 0.0
    %260 = vmatprep.subr.mxu0 0.0
    %261 = vmatpush1.msra.mxu0 0.0
    %262 = vmatprep.subr.mxu0 0.0
    %263 = vmatpush1.msra.mxu0 0.0
    %264 = vmatprep.subr.mxu0 0.0
    %265 = vmatpush1.msra.mxu0 0.0
    %266 = vmatprep.subr.mxu0 0.0
    %267 = vmatpush1.msra.mxu0 0.0
    %268 = vmatprep.subr.mxu0 0.0
    %269 = vmatpush1.msra.mxu0 0.0
    %270 = vmatprep.subr.mxu0 0.0
    %271 = vmatpush1.msra.mxu0 0.0
    %272 = vmatprep.subr.mxu0 0.0
    %273 = vmatpush1.msra.mxu0 0.0
    %274 = vmatprep.subr.mxu0 0.0
    %275 = vmatpush1.msra.mxu0 0.0
    %276 = vmatprep.subr.mxu0 0.0
    %277 = vmatpush1.msra.mxu0 0.0
    %278 = vmatprep.subr.mxu0 0.0
    %279 = vmatpush1.msra.mxu0 0.0
    %280 = vmatprep.subr.mxu0 0.0
    %281 = vmatpush1.msra.mxu0 0.0
    %282 = vmatprep.subr.mxu0 0.0
    %283 = vmatpush1.msra.mxu0 0.0
    %284 = vmatprep.subr.mxu0 0.0
    %285 = vmatpush1.msra.mxu0 0.0
    %286 = vmatprep.subr.mxu0 0.0
    %287 = vmatpush1.msra.mxu0 0.0
    %288 = vmatprep.subr.mxu0 0.0
    %289 = vmatpush1.msra.mxu0 0.0
    %290 = vmatprep.subr.mxu0 0.0
    %291 = vmatpush1.msra.mxu0 0.0
    %292 = vmatprep.subr.mxu0 0.0
    %293 = vmatpush1.msra.mxu0 0.0
    %294 = vmatprep.mubr.f32.mxu0 0.0
    %295 = vmatmul.mubr.f32.gmra.mrb[0].mxu0 %v228
    %v296 = vpop.f32.mrb[0].mxu0
    %v297 = vadd.f32 %v223, %v296
    %v298 = vpop.f32.mrb[0].mxu0
    %299 = vdwg.mxu0
    %vm300 = vcmask 254976
    %301 = vst.msk [vmem:[#allocation7] sm:$0x3] %vm300, %v297
    // Predicated region
    $region34: #{tpu_custom_call.1} parent=1 // pred_check
      _
    $region35: #{tpu_custom_call.1} parent=1 // pred_check_branch
      %303 = sbr.rel (0) target = $region37
    $region36: #{tpu_custom_call.1} parent=1 // pred_region
      %s305 = ssub.s32 32, 32
      %306 = vsyncadd [#allocation4], %s305
      %s308 = sshll.u32 [#allocation7], 4
      %s309 = int_to_ptr.vmem [resolvable:$true] %s308
      %311 = dma.vmem_to_hbm [thread:$0]  %s309, 32, %s6, [#allocation4]
    $region37: #{tpu_custom_call.1} parent=1 // pred_fallthru
      _
    // Predicated region
    $region38: #{tpu_custom_call.1} parent=1 // pred_check
      _
    $region39: #{tpu_custom_call.1} parent=1 // pred_check_branch
      %313 = sbr.rel (0) target = $region41
    $region40: #{tpu_custom_call.1} parent=1 // pred_region
      %314 = dma.done [#allocation4], 32
    $region41: #{tpu_custom_call.1} parent=1 // pred_fallthru
      _
    %315 = vsyncpa [#allocation3], 1
    %316 = vsyncpa [#allocation6], 1
    %317 = vsyncpa [#allocation4], 1

</llo_original>
